<compile_context>
chip_gen: v7x
topology: tpu7x:2x2x1
jax: 0.10.0
libtpu: 0.0.40
codegen_flags: <defaults>
</compile_context>

<pallas_src>
import functools

import jax
import jax.numpy as jnp
from jax.experimental import pallas as pl
from jax.experimental.pallas import tpu as pltpu


def conv_gemm_relu_kernel(x_ref, w_ref, o_ref, p_ref, *,
                          C_in, K, Wp, HWp, KKC, KKC_PAD):
    # x_ref: (1, C_in, SP)     zero-padded input, flattened over (Hp, Wp) + lane tail pad
    # w_ref: (C_out, KKC_PAD)  conv weight (offset-major) + folded-bias col + zero pad
    # o_ref: (1, C_out, HWp)   lane-dense output slab (columns indexed by y*Wp + x)
    # p_ref: (KKC_PAD, HWp)    VMEM scratch holding the in-kernel im2col patch matrix

    # Build the im2col patch matrix from 9 static lane-shifted views (static unroll).
    for o in range(K * K):
        ky, kx = o // K, o % K
        off = ky * Wp + kx
        p_ref[o * C_in:(o + 1) * C_in, :] = x_ref[0, :, off:off + HWp]

    # Folded bias row (all ones) and zero rows up to the sublane-padded depth.
    p_ref[KKC:KKC + 1, :] = jnp.ones((1, HWp), jnp.float32)
    if KKC_PAD > KKC + 1:
        p_ref[KKC + 1:KKC_PAD, :] = jnp.zeros((KKC_PAD - KKC - 1, HWp), jnp.float32)

    # Single fused GEMM (conv + bias) followed by ReLU.
    acc = jnp.dot(w_ref[...], p_ref[...], preferred_element_type=jnp.float32)
    o_ref[0] = jnp.maximum(acc, 0.0)


@functools.partial(jax.jit, static_argnames=("kernel_size",))
def conv2d_relu_norm(x_nchw, weight_oihw, bias, kernel_size):
    """Forward pass of Conv2DReLUNorm: conv ('same' padding) + bias + ReLU."""
    N, C_in, H, W = x_nchw.shape
    C_out = weight_oihw.shape[0]
    K = kernel_size
    p = K // 2
    Hp, Wp = H + 2 * p, W + 2 * p
    HWp = H * Wp                                    # lane-dense slab width (junk cols x >= W)
    KKC = K * K * C_in
    KKC_PAD = ((KKC + 1 + 7) // 8) * 8              # +1 bias row, padded to sublane multiple
    # Flat padded-spatial length: lane-aligned and large enough for the widest shifted read.
    SP_need = max(Hp * Wp, (K - 1) * Wp + (K - 1) + HWp)
    SP = ((SP_need + 127) // 128) * 128

    x = x_nchw.astype(jnp.float32)
    x_pad = jnp.pad(x, ((0, 0), (0, 0), (p, p), (p, p)))         # halo pad only (~tiny)
    x_flat = x_pad.reshape(N, C_in, Hp * Wp)
    x_flat = jnp.pad(x_flat, ((0, 0), (0, 0), (0, SP - Hp * Wp)))

    # Weight in offset-major order k = (ky*K + kx)*C_in + ci, plus folded-bias column
    # and zero-pad up to KKC_PAD (matches the patch-row order built in the kernel).
    w2 = weight_oihw.astype(jnp.float32).transpose(0, 2, 3, 1).reshape(C_out, KKC)
    w2 = jnp.concatenate(
        [w2,
         bias.astype(jnp.float32).reshape(C_out, 1),
         jnp.zeros((C_out, KKC_PAD - KKC - 1), jnp.float32)],
        axis=1)

    kernel = functools.partial(conv_gemm_relu_kernel, C_in=C_in, K=K, Wp=Wp,
                               HWp=HWp, KKC=KKC, KKC_PAD=KKC_PAD)

    cost = pl.CostEstimate(
        flops=2 * N * C_out * KKC * H * W,
        transcendentals=0,
        bytes_accessed=(N * C_in * SP + C_out * KKC_PAD + N * C_out * HWp) * 4)

    out = pl.pallas_call(
        kernel,
        out_shape=jax.ShapeDtypeStruct((N, C_out, HWp), jnp.float32),
        grid=(N,),                                               # 1 image per grid step
        in_specs=[
            pl.BlockSpec((1, C_in, SP), lambda n: (n, 0, 0)),
            pl.BlockSpec((C_out, KKC_PAD), lambda n: (0, 0)),
        ],
        out_specs=pl.BlockSpec((1, C_out, HWp), lambda n: (n, 0, 0)),
        scratch_shapes=[pltpu.VMEM((KKC_PAD, HWp), jnp.float32)],
        compiler_params=pltpu.CompilerParams(
            dimension_semantics=("parallel",)),                  # both TCs on v7x
        cost_estimate=cost,
    )(x_flat, w2)

    # Drop the junk columns x in [W, Wp); pure reshape + slice, no transpose.
    return out.reshape(N, C_out, H, Wp)[:, :, :, :W]


if __name__ == "__main__":
    # Module config
    input_dim, output_dim, kernel_size = 4, 8, 3
    N, H, W = 2, 16, 16
    pad = kernel_size // 2

    key = jax.random.PRNGKey(0)
    kx, kw, kb = jax.random.split(key, 3)

    # Deterministic synthetic parameters (shapes match nn.Conv2d(4, 8, 3, padding=1))
    x = jax.random.normal(kx, (N, input_dim, H, W), dtype=jnp.float32)
    fan_in = input_dim * kernel_size * kernel_size
    bound = 1.0 / (fan_in ** 0.5)
    weight = jax.random.uniform(
        kw, (output_dim, input_dim, kernel_size, kernel_size),
        minval=-bound, maxval=bound, dtype=jnp.float32)
    bias = jax.random.uniform(
        kb, (output_dim,), minval=-bound, maxval=bound, dtype=jnp.float32)

    out = conv2d_relu_norm(x, weight, bias, kernel_size=kernel_size)
    out = jax.block_until_ready(out)

    # Reference check against XLA conv (same semantics as torch.nn.Conv2d)
    ref = jax.lax.conv_general_dilated(
        x, weight, window_strides=(1, 1),
        padding=[(pad, pad), (pad, pad)],
        dimension_numbers=("NCHW", "OIHW", "NCHW"),
    ) + bias.reshape(1, output_dim, 1, 1)
    ref = jnp.maximum(ref, 0.0)

    assert out.shape == (N, output_dim, H, W), out.shape
    assert jnp.allclose(out, ref, atol=1e-4, rtol=1e-4), (
        float(jnp.max(jnp.abs(out - ref)))
    )
    print("KERNEL_OK")
</pallas_src>

<mosaic_0001>
module attributes {stable_mosaic.version = 11 : i64} {
  func.func @conv_gemm_relu_kernel(%arg0: i32, %arg1: memref<1x4x384xf32, #tpu.memory_space<vmem>>, %arg2: memref<8x40xf32, #tpu.memory_space<vmem>>, %arg3: memref<1x8x288xf32, #tpu.memory_space<vmem>>, %arg4: memref<40x288xf32, #tpu.memory_space<vmem>>) attributes {dimension_semantics = [#tpu.dimension_semantics<parallel>], iteration_bounds = array<i64: 2>, scalar_prefetch = 0 : i64, scratch_operands = 1 : i64, tpu.core_type = #tpu.core_type<tc>, window_params = [{transform_indices = @transform_0, window_bounds = array<i64: 1, 4, 384>}, {pipeline_mode = #tpu.pipeline_mode<synchronous>, transform_indices = @transform_1, window_bounds = array<i64: 8, 40>}, {transform_indices = @transform_2, window_bounds = array<i64: 1, 8, 288>}]} {
    %c0 = arith.constant 0 : index
    %c0_0 = arith.constant 0 : index
    %c0_1 = arith.constant 0 : index
    %0 = vector.load %arg1[%c0, %c0_0, %c0_1] : memref<1x4x384xf32, #tpu.memory_space<vmem>>, vector<1x4x288xf32>
    %1 = vector.shape_cast %0 : vector<1x4x288xf32> to vector<4x288xf32>
    %c0_2 = arith.constant 0 : index
    %c0_3 = arith.constant 0 : index
    %2 = vector.load %arg4[%c0_2, %c0_3] : memref<40x288xf32, #tpu.memory_space<vmem>>, vector<4x288xf32>
    tpu.vector_store %arg4[%c0_2, %c0_3], %1 {strides = array<i32>} : memref<40x288xf32, #tpu.memory_space<vmem>>, vector<4x288xf32>,
    %c0_4 = arith.constant 0 : index
    %c0_5 = arith.constant 0 : index
    %c1 = arith.constant 1 : index
    %3 = vector.load %arg1[%c0_4, %c0_5, %c1] : memref<1x4x384xf32, #tpu.memory_space<vmem>>, vector<1x4x288xf32>
    %4 = vector.shape_cast %3 : vector<1x4x288xf32> to vector<4x288xf32>
    %c4 = arith.constant 4 : index
    %c0_6 = arith.constant 0 : index
    %5 = vector.load %arg4[%c4, %c0_6] : memref<40x288xf32, #tpu.memory_space<vmem>>, vector<4x288xf32>
    tpu.vector_store %arg4[%c4, %c0_6], %4 {strides = array<i32>} : memref<40x288xf32, #tpu.memory_space<vmem>>, vector<4x288xf32>,
    %c0_7 = arith.constant 0 : index
    %c0_8 = arith.constant 0 : index
    %c2 = arith.constant 2 : index
    %6 = vector.load %arg1[%c0_7, %c0_8, %c2] : memref<1x4x384xf32, #tpu.memory_space<vmem>>, vector<1x4x288xf32>
    %7 = vector.shape_cast %6 : vector<1x4x288xf32> to vector<4x288xf32>
    %c8 = arith.constant 8 : index
    %c0_9 = arith.constant 0 : index
    %8 = vector.load %arg4[%c8, %c0_9] : memref<40x288xf32, #tpu.memory_space<vmem>>, vector<4x288xf32>
    tpu.vector_store %arg4[%c8, %c0_9], %7 {strides = array<i32>} : memref<40x288xf32, #tpu.memory_space<vmem>>, vector<4x288xf32>,
    %c0_10 = arith.constant 0 : index
    %c0_11 = arith.constant 0 : index
    %c18 = arith.constant 18 : index
    %9 = vector.load %arg1[%c0_10, %c0_11, %c18] : memref<1x4x384xf32, #tpu.memory_space<vmem>>, vector<1x4x288xf32>
    %10 = vector.shape_cast %9 : vector<1x4x288xf32> to vector<4x288xf32>
    %c12 = arith.constant 12 : index
    %c0_12 = arith.constant 0 : index
    %11 = vector.load %arg4[%c12, %c0_12] : memref<40x288xf32, #tpu.memory_space<vmem>>, vector<4x288xf32>
    tpu.vector_store %arg4[%c12, %c0_12], %10 {strides = array<i32>} : memref<40x288xf32, #tpu.memory_space<vmem>>, vector<4x288xf32>,
    %c0_13 = arith.constant 0 : index
    %c0_14 = arith.constant 0 : index
    %c19 = arith.constant 19 : index
    %12 = vector.load %arg1[%c0_13, %c0_14, %c19] : memref<1x4x384xf32, #tpu.memory_space<vmem>>, vector<1x4x288xf32>
    %13 = vector.shape_cast %12 : vector<1x4x288xf32> to vector<4x288xf32>
    %c16 = arith.constant 16 : index
    %c0_15 = arith.constant 0 : index
    %14 = vector.load %arg4[%c16, %c0_15] : memref<40x288xf32, #tpu.memory_space<vmem>>, vector<4x288xf32>
    tpu.vector_store %arg4[%c16, %c0_15], %13 {strides = array<i32>} : memref<40x288xf32, #tpu.memory_space<vmem>>, vector<4x288xf32>,
    %c0_16 = arith.constant 0 : index
    %c0_17 = arith.constant 0 : index
    %c20 = arith.constant 20 : index
    %15 = vector.load %arg1[%c0_16, %c0_17, %c20] : memref<1x4x384xf32, #tpu.memory_space<vmem>>, vector<1x4x288xf32>
    %16 = vector.shape_cast %15 : vector<1x4x288xf32> to vector<4x288xf32>
    %c20_18 = arith.constant 20 : index
    %c0_19 = arith.constant 0 : index
    %17 = vector.load %arg4[%c20_18, %c0_19] : memref<40x288xf32, #tpu.memory_space<vmem>>, vector<4x288xf32>
    tpu.vector_store %arg4[%c20_18, %c0_19], %16 {strides = array<i32>} : memref<40x288xf32, #tpu.memory_space<vmem>>, vector<4x288xf32>,
    %c0_20 = arith.constant 0 : index
    %c0_21 = arith.constant 0 : index
    %c36 = arith.constant 36 : index
    %18 = vector.load %arg1[%c0_20, %c0_21, %c36] : memref<1x4x384xf32, #tpu.memory_space<vmem>>, vector<1x4x288xf32>
    %19 = vector.shape_cast %18 : vector<1x4x288xf32> to vector<4x288xf32>
    %c24 = arith.constant 24 : index
    %c0_22 = arith.constant 0 : index
    %20 = vector.load %arg4[%c24, %c0_22] : memref<40x288xf32, #tpu.memory_space<vmem>>, vector<4x288xf32>
    tpu.vector_store %arg4[%c24, %c0_22], %19 {strides = array<i32>} : memref<40x288xf32, #tpu.memory_space<vmem>>, vector<4x288xf32>,
    %c0_23 = arith.constant 0 : index
    %c0_24 = arith.constant 0 : index
    %c37 = arith.constant 37 : index
    %21 = vector.load %arg1[%c0_23, %c0_24, %c37] : memref<1x4x384xf32, #tpu.memory_space<vmem>>, vector<1x4x288xf32>
    %22 = vector.shape_cast %21 : vector<1x4x288xf32> to vector<4x288xf32>
    %c28 = arith.constant 28 : index
    %c0_25 = arith.constant 0 : index
    %23 = vector.load %arg4[%c28, %c0_25] : memref<40x288xf32, #tpu.memory_space<vmem>>, vector<4x288xf32>
    tpu.vector_store %arg4[%c28, %c0_25], %22 {strides = array<i32>} : memref<40x288xf32, #tpu.memory_space<vmem>>, vector<4x288xf32>,
    %c0_26 = arith.constant 0 : index
    %c0_27 = arith.constant 0 : index
    %c38 = arith.constant 38 : index
    %24 = vector.load %arg1[%c0_26, %c0_27, %c38] : memref<1x4x384xf32, #tpu.memory_space<vmem>>, vector<1x4x288xf32>
    %25 = vector.shape_cast %24 : vector<1x4x288xf32> to vector<4x288xf32>
    %c32 = arith.constant 32 : index
    %c0_28 = arith.constant 0 : index
    %26 = vector.load %arg4[%c32, %c0_28] : memref<40x288xf32, #tpu.memory_space<vmem>>, vector<4x288xf32>
    tpu.vector_store %arg4[%c32, %c0_28], %25 {strides = array<i32>} : memref<40x288xf32, #tpu.memory_space<vmem>>, vector<4x288xf32>,
    %cst = arith.constant 1.000000e+00 : f32
    %27 = vector.broadcast %cst : f32 to vector<1x288xf32>
    %c36_29 = arith.constant 36 : index
    %c0_30 = arith.constant 0 : index
    %28 = vector.load %arg4[%c36_29, %c0_30] : memref<40x288xf32, #tpu.memory_space<vmem>>, vector<1x288xf32>
    tpu.vector_store %arg4[%c36_29, %c0_30], %27 {strides = array<i32>} : memref<40x288xf32, #tpu.memory_space<vmem>>, vector<1x288xf32>,
    %cst_31 = arith.constant 0.000000e+00 : f32
    %29 = vector.broadcast %cst_31 : f32 to vector<3x288xf32>
    %c37_32 = arith.constant 37 : index
    %c0_33 = arith.constant 0 : index
    %30 = vector.load %arg4[%c37_32, %c0_33] : memref<40x288xf32, #tpu.memory_space<vmem>>, vector<3x288xf32>
    tpu.vector_store %arg4[%c37_32, %c0_33], %29 {strides = array<i32>} : memref<40x288xf32, #tpu.memory_space<vmem>>, vector<3x288xf32>,
    %c0_34 = arith.constant 0 : index
    %c0_35 = arith.constant 0 : index
    %31 = vector.load %arg2[%c0_34, %c0_35] : memref<8x40xf32, #tpu.memory_space<vmem>>, vector<8x40xf32>
    %c0_36 = arith.constant 0 : index
    %c0_37 = arith.constant 0 : index
    %32 = vector.load %arg4[%c0_36, %c0_37] : memref<40x288xf32, #tpu.memory_space<vmem>>, vector<40x288xf32>
    %cst_38 = arith.constant dense<0.000000e+00> : vector<8x288xf32>
    %33 = tpu.matmul %31, %32, %cst_38 {dimension_numbers = #tpu.dot_dimension_numbers<[1], [0], [0], [1], [0, 0, 1, 1], [], []>} : vector<8x40xf32>, vector<40x288xf32>, vector<8x288xf32> -> vector<8x288xf32>
    %cst_39 = arith.constant 0.000000e+00 : f32
    %34 = vector.broadcast %cst_39 : f32 to vector<8x288xf32>
    %35 = arith.maximumf %33, %34 : vector<8x288xf32>
    %c0_40 = arith.constant 0 : index
    %c0_41 = arith.constant 0 : index
    %c0_42 = arith.constant 0 : index
    %36 = vector.load %arg3[%c0_40, %c0_41, %c0_42] : memref<1x8x288xf32, #tpu.memory_space<vmem>>, vector<1x8x288xf32>
    %37 = vector.shape_cast %36 : vector<1x8x288xf32> to vector<8x288xf32>
    %38 = vector.shape_cast %35 : vector<8x288xf32> to vector<1x8x288xf32>
    tpu.vector_store %arg3[%c0_40, %c0_41, %c0_42], %38 {strides = array<i32>} : memref<1x8x288xf32, #tpu.memory_space<vmem>>, vector<1x8x288xf32>,
    return
  }
  func.func @transform_0(%arg0: i32) -> (i32, i32, i32) {
    %c0_i32 = arith.constant 0 : i32
    %c0_i32_0 = arith.constant 0 : i32
    %c0_i32_1 = arith.constant 0 : i32
    return %arg0, %c0_i32, %c0_i32_0 : i32, i32, i32
  }
  func.func @transform_1(%arg0: i32) -> (i32, i32) {
    %c0_i32 = arith.constant 0 : i32
    %c0_i32_0 = arith.constant 0 : i32
    %c0_i32_1 = arith.constant 0 : i32
    return %c0_i32, %c0_i32_0 : i32, i32
  }
  func.func @transform_2(%arg0: i32) -> (i32, i32, i32) {
    %c0_i32 = arith.constant 0 : i32
    %c0_i32_0 = arith.constant 0 : i32
    %c0_i32_1 = arith.constant 0 : i32
    return %arg0, %c0_i32, %c0_i32_0 : i32, i32, i32
  }
}

</mosaic_0001>

<llo_original>
// kernel: conv2d_relu_norm.1
$region0: #{conv2d_relu_norm.1}
  #allocation0 [shape = 'u32[]', space=smem, size = 0x4, offset = 0x4, fixed_abs, tag = 'smem constant byte address 0x4 - core index']
  #allocation1 [shape = 'u32[144,128]{1,0:T(1,128)}', space=vmem, size = 0x12000, scoped, tag = 'internal scratch']
  #allocation2 [shape = 'f32[40,288]{1,0:T(8,128)}', space=vmem, size = 0xf000, scoped, tag = 'scratch operand']
  %s0 = inlined_call_operand.vmem [shape: f32[2,4,384], index: 0, kind: input, shape index: {}]
  %s1 = inlined_call_operand.vmem [shape: f32[8,40], index: 1, kind: input, shape index: {}]
  %s2 = inlined_call_operand.vmem [shape: f32[2,8,288], index: 2, kind: output, shape index: {}]
  %s3 = sld [smem:[#allocation0]]
  $region41: #{conv2d_relu_norm.1} parent=0
    _
  %s5 = ssub.s32 1, %s3
  %s6 = scalar_select 0, %s5, %s3
  loop: start=0, step=1, limit=4
  $region2: #{conv2d_relu_norm.1} parent=0 // loop_pre_header
    _
  $region3: #{conv2d_relu_norm.1} parent=0 // loop_header
    %s8 = sphi 0, %s12
    %p9 = scmp.ge.s32.totalorder %s8, 4
    %s18 = sphi 0, %s20
    %s21 = sphi 0, %s18
    %s22 = sphi 0, %s21
    %s38 = sphi 0, %s22
    %s42 = sphi 0, %s42
    %s44 = sphi 0, %s42
    %s45 = sphi 0, %s44
    %s59 = sphi 0, %s45
    %s65 = sphi 0, %s67
    %s68 = sphi 0, %s65
    %s69 = sphi 0, %s68
    %s85 = sphi 0, %s69
  $region4: #{conv2d_relu_norm.1} parent=0 // loop_header_branch
    %11 = sbr.rel (%p9) target = $region8
  $region5: #{conv2d_relu_norm.1} parent=0 // loop_body
    %s13 = ssub.s32 %s8, 1
    %s14 = ssub.s32 %s8, 2
    %s15 = sadd.s32 %s8, 1
    %s16 = ssub.s32 %s8, %s15
    %p17 = scmp.eq.s32.totalorder %s16, 0
    %s19 = sadd.s32 %s18, 1
    %s20 = scalar_select %p17, %s18, %s19
    %p23 = pneg %p17
    %p24 = scmp.eq.s32.totalorder %s8, 1
    %p25 = por %p23, %p24
    %p26 = scmp.ne.s32.totalorder %s18, %s21
    %p27 = scmp.eq.s32.totalorder %s8, 0
    %p28 = por %p26, %p27
    %p29 = scmp.ne.s32.totalorder %s18, %s21
    %p30 = scmp.eq.s32.totalorder %s13, 1
    %p31 = por %p29, %p30
    %p32 = scmp.ne.s32.totalorder %s21, %s22
    %p33 = scmp.eq.s32.totalorder %s13, 0
    %p34 = por %p32, %p33
    %p35 = scmp.ne.s32.totalorder %s21, %s22
    %p36 = scmp.eq.s32.totalorder %s14, 1
    %p37 = por %p35, %p36
    %p39 = scmp.ne.s32.totalorder %s22, %s38
    %p40 = scmp.eq.s32.totalorder %s14, 0
    %p41 = por %p39, %p40
    %s43 = sadd.s32 %s42, 1
    %p46 = scmp.eq.s32.totalorder %s8, 1
    %p47 = scmp.ne.s32.totalorder %s42, %s44
    %p48 = scmp.eq.s32.totalorder %s8, 0
    %p49 = por %p47, %p48
    %p50 = scmp.ne.s32.totalorder %s42, %s44
    %p51 = scmp.eq.s32.totalorder %s13, 1
    %p52 = por %p50, %p51
    %p53 = scmp.ne.s32.totalorder %s44, %s45
    %p54 = scmp.eq.s32.totalorder %s13, 0
    %p55 = por %p53, %p54
    %p56 = scmp.ne.s32.totalorder %s44, %s45
    %p57 = scmp.eq.s32.totalorder %s14, 1
    %p58 = por %p56, %p57
    %p60 = scmp.ne.s32.totalorder %s45, %s59
    %p61 = scmp.eq.s32.totalorder %s14, 0
    %p62 = por %p60, %p61
    %s63 = ssub.s32 %s8, %s15
    %p64 = scmp.eq.s32.totalorder %s63, 0
    %s66 = sadd.s32 %s65, 1
    %s67 = scalar_select %p64, %s65, %s66
    %p70 = pneg %p64
    %p71 = scmp.eq.s32.totalorder %s8, 1
    %p72 = por %p70, %p71
    %p73 = scmp.ne.s32.totalorder %s65, %s68
    %p74 = scmp.eq.s32.totalorder %s8, 0
    %p75 = por %p73, %p74
    %p76 = scmp.ne.s32.totalorder %s65, %s68
    %p77 = scmp.eq.s32.totalorder %s13, 1
    %p78 = por %p76, %p77
    %p79 = scmp.ne.s32.totalorder %s68, %s69
    %p80 = scmp.eq.s32.totalorder %s13, 0
    %p81 = por %p79, %p80
    %p82 = scmp.ne.s32.totalorder %s68, %s69
    %p83 = scmp.eq.s32.totalorder %s14, 1
    %p84 = por %p82, %p83
    %p86 = scmp.ne.s32.totalorder %s69, %s85
    %p87 = scmp.eq.s32.totalorder %s14, 0
    %p88 = por %p86, %p87
    %p89 = scmp.le.s32.totalorder 1, %s8
    %p90 = scmp.lt.s32.totalorder %s8, 3
    %p91 = pnand %p89, %p90
    %p92 = pneg %p91
    // Predicated region
    $region9: #{conv2d_relu_norm.1} parent=5 // pred_check
      _
    $region10: #{conv2d_relu_norm.1} parent=5 // pred_check_branch
      %94 = sbr.rel (%p91) target = $region12
    $region11: #{conv2d_relu_norm.1} parent=5 // pred_region
      %s95 = ssub.s32 %s8, 1
      // Predicated region
      $region13: #{conv2d_relu_norm.1} parent=11 // pred_check
        %p96 = pneg %p55
      $region14: #{conv2d_relu_norm.1} parent=11 // pred_check_branch
        %98 = sbr.rel (%p96) target = $region16
      $region15: #{conv2d_relu_norm.1} parent=11 // pred_region
        _
      $region16: #{conv2d_relu_norm.1} parent=11 // pred_fallthru
        _
    $region12: #{conv2d_relu_norm.1} parent=5 // pred_fallthru
      _
    %p99 = scmp.lt.s32.totalorder %s8, 2
    // Predicated region
    $region17: #{conv2d_relu_norm.1} parent=5 // pred_check
      %p100 = pneg %p99
    $region18: #{conv2d_relu_norm.1} parent=5 // pred_check_branch
      %102 = sbr.rel (%p100) target = $region20
    $region19: #{conv2d_relu_norm.1} parent=5 // pred_region
      // Predicated region
      $region21: #{conv2d_relu_norm.1} parent=19 // pred_check
        %p103 = pneg %p28
      $region22: #{conv2d_relu_norm.1} parent=19 // pred_check_branch
        %105 = sbr.rel (%p103) target = $region24
      $region23: #{conv2d_relu_norm.1} parent=19 // pred_region
        %p106 = scmp.lt.s32.totalorder %s8, 1
        %s107 = scalar_select %p106, %s8, 1
        %s108 = smul.addr %s107, 3
        %s109 = smul.addr %s108, 4
        %s110 = scalar_lea.vmem %s0, %s109
      $region24: #{conv2d_relu_norm.1} parent=19 // pred_fallthru
        _
    $region20: #{conv2d_relu_norm.1} parent=5 // pred_fallthru
      _
    %p111 = scmp.le.s32.totalorder 1, %s8
    %p112 = scmp.lt.s32.totalorder %s8, 3
    %p113 = pnand %p111, %p112
    %p114 = pneg %p113
    // Predicated region
    $region25: #{conv2d_relu_norm.1} parent=5 // pred_check
      _
    $region26: #{conv2d_relu_norm.1} parent=5 // pred_check_branch
      %116 = sbr.rel (%p113) target = $region28
    $region27: #{conv2d_relu_norm.1} parent=5 // pred_region
      %s117 = ssub.s32 %s8, 1
      %p118 = scmp.lt.s32.totalorder %s13, 1
      %s119 = scalar_select %p118, %s13, 1
      %s120 = smul.addr %s119, 3
      %s121 = smul.addr %s120, 4
      %s122 = scalar_lea.vmem %s0, %s121
      %p123 = pneg %p34
      %p124 = pneg %p31
      %p125 = pneg %p55
      %p126 = pneg %p52
      %p127 = pneg %p81
      %p128 = pneg %p78
      %p129 = scmp.lt.s32.totalorder %s13, 1
      %s130 = scalar_select %p129, %s13, 1
      %s131 = smul.addr %s130, 3
      %s132 = smul.addr %s131, 8
      %s133 = scalar_lea.vmem %s2, %s132
      %p134 = scmp.lt.s32.totalorder %s13, 1
      %s135 = scalar_select %p134, %s13, 1
      %s136 = smul.addr %s135, 3
      %s137 = smul.addr %s136, 4
      %s138 = scalar_lea.vmem %s0, %s137
      %p139 = scmp.lt.s32.totalorder %s13, 1
      %s140 = scalar_select %p139, %s13, 1
      %s141 = smul.addr %s140, 3
      %s142 = smul.addr %s141, 8
      %s143 = scalar_lea.vmem %s2, %s142
      %v144 = vld [vmem:[%s138] sm:$0xff]
      %v145 = vld [vmem:[%s138 + $0x8] sm:$0xf]
      %v147 = vcombine.high %v144, %v144
      %149 = vst [vmem:[#allocation2] sm:$0xf] %v144
      %150 = vst [vmem:[#allocation2 + $0x8] sm:$0xf] %v147
      %vm151 = vcmask 257024
      %152 = vst.msk [vmem:[#allocation2 + $0x10] sm:$0xf] %vm151, %v145
      %v153 = vld [vmem:[%s138] sm:$0xff]
      %v154 = vld [vmem:[%s138 + $0x8] sm:$0xf]
      %v157 = vcombine.low %v153, %v153
      %v158 = vcombine.low %v154, %v154
      %159 = vrot.lane.b32.xlu0 %v157, 127
      %v160 = vpop.permute.xlu0 %159
      %161 = vrot.lane.b32.xlu0 %v153, 127
      %v162 = vpop.permute.xlu0 %161
      %163 = vrot.lane.b32.xlu0 %v158, 127
      %v164 = vpop.permute.xlu0 %163
      %vm165 = vcmask 1039360
      %v166 = vsel %vm165, %v160, %v162
      %v167 = vsel %vm165, %v162, %v164
      %171 = vst [vmem:[#allocation2] sm:$0xf0] %v166
      %172 = vst [vmem:[#allocation2 + $0x8] sm:$0xf0] %v167
      %vm173 = vcmask 261124
      %174 = vst.msk [vmem:[#allocation2 + $0x10] sm:$0xf0] %vm173, %v164
      %v175 = vld [vmem:[%s138] sm:$0xff]
      %v176 = vld [vmem:[%s138 + $0x8] sm:$0xf]
      %v179 = vcombine.high %v175, %v175
      %180 = vrot.lane.b32.xlu0 %v175, 126
      %v181 = vpop.permute.xlu0 %180
      %182 = vrot.lane.b32.xlu0 %v179, 126
      %v183 = vpop.permute.xlu0 %182
      %184 = vrot.lane.b32.xlu0 %v176, 126
      %v185 = vpop.permute.xlu0 %184
      %vm186 = vcmask 1031168
      %v187 = vsel %vm186, %v181, %v183
      %v188 = vsel %vm186, %v183, %v185
      %192 = vst [vmem:[#allocation2 + $0x18] sm:$0xf] %v187
      %193 = vst [vmem:[#allocation2 + $0x20] sm:$0xf] %v188
      %194 = vst.msk [vmem:[#allocation2 + $0x28] sm:$0xf] %vm151, %v185
      %v195 = vld [vmem:[%s138] sm:$0xff]
      %v196 = vld [vmem:[%s138 + $0x8] sm:$0xf]
      %v199 = vcombine.low %v195, %v195
      %v200 = vcombine.low %v196, %v196
      %201 = vrot.lane.b32.xlu0 %v199, 110
      %v202 = vpop.permute.xlu0 %201
      %203 = vrot.lane.b32.xlu0 %v195, 110
      %v204 = vpop.permute.xlu0 %203
      %205 = vrot.lane.b32.xlu0 %v200, 110
      %v206 = vpop.permute.xlu0 %205
      %vm207 = vcmask 900096
      %v208 = vsel %vm207, %v202, %v204
      %v209 = vsel %vm207, %v204, %v206
      %213 = vst [vmem:[#allocation2 + $0x18] sm:$0xf0] %v208
      %214 = vst [vmem:[#allocation2 + $0x20] sm:$0xf0] %v209
      %215 = vst.msk [vmem:[#allocation2 + $0x28] sm:$0xf0] %vm173, %v206
      %v216 = vld [vmem:[%s138] sm:$0xff]
      %v217 = vld [vmem:[%s138 + $0x8] sm:$0xf]
      %v220 = vcombine.high %v216, %v216
      %221 = vrot.lane.b32.xlu0 %v216, 109
      %v222 = vpop.permute.xlu0 %221
      %223 = vrot.lane.b32.xlu0 %v220, 109
      %v224 = vpop.permute.xlu0 %223
      %225 = vrot.lane.b32.xlu0 %v217, 109
      %v226 = vpop.permute.xlu0 %225
      %vm227 = vcmask 891904
      %v228 = vsel %vm227, %v222, %v224
      %v229 = vsel %vm227, %v224, %v226
      %233 = vst [vmem:[#allocation2 + $0x30] sm:$0xf] %v228
      %234 = vst [vmem:[#allocation2 + $0x38] sm:$0xf] %v229
      %235 = vst.msk [vmem:[#allocation2 + $0x40] sm:$0xf] %vm151, %v226
      %v236 = vld [vmem:[%s138] sm:$0xff]
      %v237 = vld [vmem:[%s138 + $0x8] sm:$0xf]
      %v240 = vcombine.low %v236, %v236
      %v241 = vcombine.low %v237, %v237
      %242 = vrot.lane.b32.xlu0 %v240, 108
      %v243 = vpop.permute.xlu0 %242
      %244 = vrot.lane.b32.xlu0 %v236, 108
      %v245 = vpop.permute.xlu0 %244
      %246 = vrot.lane.b32.xlu0 %v241, 108
      %v247 = vpop.permute.xlu0 %246
      %vm248 = vcmask 883712
      %v249 = vsel %vm248, %v243, %v245
      %v250 = vsel %vm248, %v245, %v247
      %254 = vst [vmem:[#allocation2 + $0x30] sm:$0xf0] %v249
      %255 = vst [vmem:[#allocation2 + $0x38] sm:$0xf0] %v250
      %256 = vst.msk [vmem:[#allocation2 + $0x40] sm:$0xf0] %vm173, %v247
      %v257 = vld [vmem:[%s138] sm:$0xff]
      %v258 = vld [vmem:[%s138 + $0x8] sm:$0xf]
      %v261 = vcombine.high %v257, %v257
      %262 = vrot.lane.b32.xlu0 %v257, 92
      %v263 = vpop.permute.xlu0 %262
      %264 = vrot.lane.b32.xlu0 %v261, 92
      %v265 = vpop.permute.xlu0 %264
      %266 = vrot.lane.b32.xlu0 %v258, 92
      %v267 = vpop.permute.xlu0 %266
      %vm268 = vcmask 752640
      %v269 = vsel %vm268, %v263, %v265
      %v270 = vsel %vm268, %v265, %v267
      %274 = vst [vmem:[#allocation2 + $0x48] sm:$0xf] %v269
      %275 = vst [vmem:[#allocation2 + $0x50] sm:$0xf] %v270
      %276 = vst.msk [vmem:[#allocation2 + $0x58] sm:$0xf] %vm151, %v267
      %v277 = vld [vmem:[%s138] sm:$0xff]
      %v278 = vld [vmem:[%s138 + $0x8] sm:$0xf]
      %v281 = vcombine.low %v277, %v277
      %v282 = vcombine.low %v278, %v278
      %283 = vrot.lane.b32.xlu0 %v281, 91
      %v284 = vpop.permute.xlu0 %283
      %285 = vrot.lane.b32.xlu0 %v277, 91
      %v286 = vpop.permute.xlu0 %285
      %287 = vrot.lane.b32.xlu0 %v282, 91
      %v288 = vpop.permute.xlu0 %287
      %vm289 = vcmask 744448
      %v290 = vsel %vm289, %v284, %v286
      %v291 = vsel %vm289, %v286, %v288
      %295 = vst [vmem:[#allocation2 + $0x48] sm:$0xf0] %v290
      %296 = vst [vmem:[#allocation2 + $0x50] sm:$0xf0] %v291
      %297 = vst.msk [vmem:[#allocation2 + $0x58] sm:$0xf0] %vm173, %v288
      %v298 = vld [vmem:[%s138] sm:$0xff]
      %v299 = vld [vmem:[%s138 + $0x8] sm:$0xf]
      %v302 = vcombine.high %v298, %v298
      %303 = vrot.lane.b32.xlu0 %v298, 90
      %v304 = vpop.permute.xlu0 %303
      %305 = vrot.lane.b32.xlu0 %v302, 90
      %v306 = vpop.permute.xlu0 %305
      %307 = vrot.lane.b32.xlu0 %v299, 90
      %v308 = vpop.permute.xlu0 %307
      %vm309 = vcmask 736256
      %v310 = vsel %vm309, %v304, %v306
      %v311 = vsel %vm309, %v306, %v308
      %315 = vst [vmem:[#allocation2 + $0x60] sm:$0xf] %v310
      %316 = vst [vmem:[#allocation2 + $0x68] sm:$0xf] %v311
      %317 = vst.msk [vmem:[#allocation2 + $0x70] sm:$0xf] %vm151, %v308
      %v318 = vlaneseq
      %vm319 = vcmp.ge.s32.totalorder %v318, 0
      %vm320 = vcmp.lt.s32.totalorder %v318, 288
      %vm321 = vmand %vm319, %vm320
      %s322 = scalar_lea.vmem [#allocation2], 100
      %323 = vst.msk [vmem:[%s322] ss:$8 sm:$0x7] %vm321, 1.0
      %324 = vst.msk [vmem:[%s322] ss:$8 sm:$0x0] %vm321, 1.0
      %325 = vst [vmem:[#allocation2 + $0x60] sm:$0xe0] 0.0
      %326 = vst [vmem:[#allocation2 + $0x68] sm:$0xe0] 0.0
      %vm327 = vcmask 261125
      %328 = vst.msk [vmem:[#allocation2 + $0x70] sm:$0xe0] %vm327, 0.0
      %v329 = vld [vmem:[%s1] sm:$0xff]
      %v330 = vld [vmem:[#allocation2] sm:$0xff]
      %v331 = vld [vmem:[#allocation2 + $0x8] sm:$0xff]
      %v332 = vld [vmem:[#allocation2 + $0x10] sm:$0xff]
      %v333 = vld [vmem:[#allocation2 + $0x18] sm:$0xff]
      %v334 = vld [vmem:[#allocation2 + $0x20] sm:$0xff]
      %v335 = vld [vmem:[#allocation2 + $0x28] sm:$0xff]
      %v336 = vld [vmem:[#allocation2 + $0x30] sm:$0xff]
      %v337 = vld [vmem:[#allocation2 + $0x38] sm:$0xff]
      %v338 = vld [vmem:[#allocation2 + $0x40] sm:$0xff]
      %v339 = vld [vmem:[#allocation2 + $0x48] sm:$0xff]
      %v340 = vld [vmem:[#allocation2 + $0x50] sm:$0xff]
      %v341 = vld [vmem:[#allocation2 + $0x58] sm:$0xff]
      %v342 = vld [vmem:[#allocation2 + $0x60] sm:$0xff]
      %v343 = vld [vmem:[#allocation2 + $0x68] sm:$0xff]
      %v344 = vld [vmem:[#allocation2 + $0x70] sm:$0xff]
      %vm345 = vcmask 326656
      %v347 = vsel %vm345, %v329, 0
      %349 = vmatprep.subr.mxu0 %v331
      %350 = vmatpush1.msra.mxu0 %v330
      %351 = vmatprep.subr.mxu0 %v334
      %352 = vmatpush1.msra.mxu0 %v333
      %353 = vmatprep.subr.mxu0 %v337
      %354 = vmatpush1.msra.mxu0 %v336
      %355 = vmatprep.subr.mxu0 %v340
      %356 = vmatpush1.msra.mxu0 %v339
      %357 = vmatprep.subr.mxu0 %v343
      %358 = vmatpush1.msra.mxu0 %v342
      %359 = vmatprep.subr.mxu0 0.0
      %360 = vmatpush1.msra.mxu0 0.0
      %361 = vmatprep.subr.mxu0 0.0
      %362 = vmatpush1.msra.mxu0 0.0
      %363 = vmatprep.subr.mxu0 0.0
      %364 = vmatpush1.msra.mxu0 0.0
      %365 = vmatprep.subr.mxu0 0.0
      %366 = vmatpush1.msra.mxu0 0.0
      %367 = vmatprep.subr.mxu0 0.0
      %368 = vmatpush1.msra.mxu0 0.0
      %369 = vmatprep.subr.mxu0 0.0
      %370 = vmatpush1.msra.mxu0 0.0
      %371 = vmatprep.subr.mxu0 0.0
      %372 = vmatpush1.msra.mxu0 0.0
      %373 = vmatprep.subr.mxu0 0.0
      %374 = vmatpush1.msra.mxu0 0.0
      %375 = vmatprep.subr.mxu0 0.0
      %376 = vmatpush1.msra.mxu0 0.0
      %377 = vmatprep.subr.mxu0 0.0
      %378 = vmatpush1.msra.mxu0 0.0
      %379 = vmatprep.subr.mxu0 0.0
      %380 = vmatpush1.msra.mxu0 0.0
      %381 = vmatprep.subr.mxu0 0.0
      %382 = vmatpush1.msra.mxu0 0.0
      %383 = vmatprep.subr.mxu0 0.0
      %384 = vmatpush1.msra.mxu0 0.0
      %385 = vmatprep.subr.mxu0 0.0
      %386 = vmatpush1.msra.mxu0 0.0
      %387 = vmatprep.subr.mxu0 0.0
      %388 = vmatpush1.msra.mxu0 0.0
      %389 = vmatprep.subr.mxu0 0.0
      %390 = vmatpush1.msra.mxu0 0.0
      %391 = vmatprep.subr.mxu0 0.0
      %392 = vmatpush1.msra.mxu0 0.0
      %393 = vmatprep.subr.mxu0 0.0
      %394 = vmatpush1.msra.mxu0 0.0
      %395 = vmatprep.subr.mxu0 0.0
      %396 = vmatpush1.msra.mxu0 0.0
      %397 = vmatprep.subr.mxu0 0.0
      %398 = vmatpush1.msra.mxu0 0.0
      %399 = vmatprep.subr.mxu0 0.0
      %400 = vmatpush1.msra.mxu0 0.0
      %401 = vmatprep.subr.mxu0 0.0
      %402 = vmatpush1.msra.mxu0 0.0
      %403 = vmatprep.subr.mxu0 0.0
      %404 = vmatpush1.msra.mxu0 0.0
      %405 = vmatprep.subr.mxu0 0.0
      %406 = vmatpush1.msra.mxu0 0.0
      %407 = vmatprep.subr.mxu0 0.0
      %408 = vmatpush1.msra.mxu0 0.0
      %409 = vmatprep.subr.mxu0 0.0
      %410 = vmatpush1.msra.mxu0 0.0
      %411 = vmatprep.subr.mxu0 0.0
      %412 = vmatpush1.msra.mxu0 0.0
      %413 = vmatprep.mubr.f32.mxu0 0.0
      %414 = vmatmul.mubr.f32.gmra.mrb[0].mxu0 %v347
      %v415 = vpop.f32.mrb[0].mxu0
      %v416 = vadd.f32 0.0, %v415
      %v417 = vpop.f32.mrb[0].mxu0
      %v418 = vadd.f32 0.0, %v417
      %419 = vdwg.mxu0
      %420 = vmatprep.subr.mxu0 0.0
      %421 = vmatpush1.msra.mxu0 %v332
      %422 = vmatprep.subr.mxu0 0.0
      %423 = vmatpush1.msra.mxu0 %v335
      %424 = vmatprep.subr.mxu0 0.0
      %425 = vmatpush1.msra.mxu0 %v338
      %426 = vmatprep.subr.mxu0 0.0
      %427 = vmatpush1.msra.mxu0 %v341
      %428 = vmatprep.subr.mxu0 0.0
      %429 = vmatpush1.msra.mxu0 %v344
      %430 = vmatprep.subr.mxu0 0.0
      %431 = vmatpush1.msra.mxu0 0.0
      %432 = vmatprep.subr.mxu0 0.0
      %433 = vmatpush1.msra.mxu0 0.0
      %434 = vmatprep.subr.mxu0 0.0
      %435 = vmatpush1.msra.mxu0 0.0
      %436 = vmatprep.subr.mxu0 0.0
      %437 = vmatpush1.msra.mxu0 0.0
      %438 = vmatprep.subr.mxu0 0.0
      %439 = vmatpush1.msra.mxu0 0.0
      %440 = vmatprep.subr.mxu0 0.0
      %441 = vmatpush1.msra.mxu0 0.0
      %442 = vmatprep.subr.mxu0 0.0
      %443 = vmatpush1.msra.mxu0 0.0
      %444 = vmatprep.subr.mxu0 0.0
      %445 = vmatpush1.msra.mxu0 0.0
      %446 = vmatprep.subr.mxu0 0.0
      %447 = vmatpush1.msra.mxu0 0.0
      %448 = vmatprep.subr.mxu0 0.0
      %449 = vmatpush1.msra.mxu0 0.0
      %450 = vmatprep.subr.mxu0 0.0
      %451 = vmatpush1.msra.mxu0 0.0
      %452 = vmatprep.subr.mxu0 0.0
      %453 = vmatpush1.msra.mxu0 0.0
      %454 = vmatprep.subr.mxu0 0.0
      %455 = vmatpush1.msra.mxu0 0.0
      %456 = vmatprep.subr.mxu0 0.0
      %457 = vmatpush1.msra.mxu0 0.0
      %458 = vmatprep.subr.mxu0 0.0
      %459 = vmatpush1.msra.mxu0 0.0
      %460 = vmatprep.subr.mxu0 0.0
      %461 = vmatpush1.msra.mxu0 0.0
      %462 = vmatprep.subr.mxu0 0.0
      %463 = vmatpush1.msra.mxu0 0.0
      %464 = vmatprep.subr.mxu0 0.0
      %465 = vmatpush1.msra.mxu0 0.0
      %466 = vmatprep.subr.mxu0 0.0
      %467 = vmatpush1.msra.mxu0 0.0
      %468 = vmatprep.subr.mxu0 0.0
      %469 = vmatpush1.msra.mxu0 0.0
      %470 = vmatprep.subr.mxu0 0.0
      %471 = vmatpush1.msra.mxu0 0.0
      %472 = vmatprep.subr.mxu0 0.0
      %473 = vmatpush1.msra.mxu0 0.0
      %474 = vmatprep.subr.mxu0 0.0
      %475 = vmatpush1.msra.mxu0 0.0
      %476 = vmatprep.subr.mxu0 0.0
      %477 = vmatpush1.msra.mxu0 0.0
      %478 = vmatprep.subr.mxu0 0.0
      %479 = vmatpush1.msra.mxu0 0.0
      %480 = vmatprep.subr.mxu0 0.0
      %481 = vmatpush1.msra.mxu0 0.0
      %482 = vmatprep.subr.mxu0 0.0
      %483 = vmatpush1.msra.mxu0 0.0
      %484 = vmatprep.mubr.f32.mxu0 0.0
      %485 = vmatmul.mubr.f32.gmra.mrb[0].mxu0 %v347
      %v486 = vpop.f32.mrb[0].mxu0
      %v487 = vadd.f32 0.0, %v486
      %v488 = vpop.f32.mrb[0].mxu0
      %489 = vdwg.mxu0
      %v490 = vmax.f32 %v416, 0.0
      %v491 = vmax.f32 %v418, 0.0
      %v492 = vmax.f32 %v487, 0.0
      %493 = vst [vmem:[%s143] sm:$0xff] %v490
      %494 = vst [vmem:[%s143 + $0x8] sm:$0xff] %v491
      %vm495 = vcmask 261120
      %496 = vst.msk [vmem:[%s143 + $0x10] sm:$0xff] %vm495, %v492
      %p497 = scmp.lt.s32.totalorder %s13, 1
      %s498 = scalar_select %p497, %s13, 1
      %s499 = smul.addr %s498, 3
      %s500 = smul.addr %s499, 8
      %s501 = scalar_lea.vmem %s2, %s500
      // Predicated region
      $region29: #{conv2d_relu_norm.1} parent=27 // pred_check
        %p502 = pneg %p78
      $region30: #{conv2d_relu_norm.1} parent=27 // pred_check_branch
        %504 = sbr.rel (%p502) target = $region32
      $region31: #{conv2d_relu_norm.1} parent=27 // pred_region
        _
      $region32: #{conv2d_relu_norm.1} parent=27 // pred_fallthru
        _
    $region28: #{conv2d_relu_norm.1} parent=5 // pred_fallthru
      _
    %p505 = scmp.le.s32.totalorder 2, %s8
    // Predicated region
    $region33: #{conv2d_relu_norm.1} parent=5 // pred_check
      %p506 = pneg %p505
    $region34: #{conv2d_relu_norm.1} parent=5 // pred_check_branch
      %508 = sbr.rel (%p506) target = $region36
    $region35: #{conv2d_relu_norm.1} parent=5 // pred_region
      %s509 = ssub.s32 %s8, 2
      // Predicated region
      $region37: #{conv2d_relu_norm.1} parent=35 // pred_check
        %p510 = pneg %p84
      $region38: #{conv2d_relu_norm.1} parent=35 // pred_check_branch
        %512 = sbr.rel (%p510) target = $region40
      $region39: #{conv2d_relu_norm.1} parent=35 // pred_region
        %p513 = scmp.lt.s32.totalorder %s14, 1
        %s514 = scalar_select %p513, %s14, 1
        %s515 = smul.addr %s514, 3
        %s516 = smul.addr %s515, 8
        %s517 = scalar_lea.vmem %s2, %s516
      $region40: #{conv2d_relu_norm.1} parent=35 // pred_fallthru
        _
    $region36: #{conv2d_relu_norm.1} parent=5 // pred_fallthru
      _
  $region6: #{conv2d_relu_norm.1} parent=0 // loop_footer
    %s12 = sadd.s32 1, %s8
  $region7: #{conv2d_relu_norm.1} parent=0 // loop_footer_branch
    %7 = sbr.rel target = $region3
  $region8: #{conv2d_relu_norm.1} parent=0 // loop_exit
    _

</llo_original>
